<compile_context>
chip_gen: v7x
topology: tpu7x:2x2x1
jax: 0.10.0
libtpu: 0.0.40
codegen_flags: <defaults>
</compile_context>

<pallas_src>
import functools

import jax
import jax.numpy as jnp
from jax.experimental import pallas as pl
from jax.experimental.pallas import tpu as pltpu


def _round_up(x, m):
    return ((x + m - 1) // m) * m


def actor_kernel(x_ref, w_ref, b_ref, out_ref, *, sd, hd, od):
    """Fused Actor forward on one batch tile.

    x_ref   : [TM, sd]      bf16  batch tile of states (zero-padded)
    w_ref   : [sd+hd, W]    bf16  rows [0, sd)      = W1 (padded to hd lanes)
                                  rows [sd, sd+hd)  = [Wa | Wl] (padded to od lanes)
    b_ref   : [8, W]        f32   row 0 = b1 (padded), row 1 = [ba | bl] (padded)
    out_ref : [TM, od]      f32   lane-dense fused output [mu | logvar | 0-pad]
    """
    x = x_ref[...]
    w1 = w_ref[0:sd, 0:hd]
    wh = w_ref[sd:sd + hd, 0:od]
    b1 = b_ref[0:1, 0:hd]
    bh = b_ref[1:2, 0:od]

    # Hidden layer: bf16 operands on the MXU, f32 accumulate, f32 bias-add + tanh.
    h = jnp.tanh(jnp.dot(x, w1, preferred_element_type=jnp.float32) + b1)

    # Fused action/logvar heads: single MXU pass, single lane-dense (128-wide) store.
    out = jnp.dot(h.astype(jnp.bfloat16), wh,
                  preferred_element_type=jnp.float32) + bh
    out_ref[...] = out.astype(out_ref.dtype)


def pack_actor_params(params):
    """Pack the 6 Actor parameters into one bf16 weight slab and one f32 bias slab."""
    w1, b1 = params["w1"], params["b1"]          # [S, H], [1, H]
    wa, ba = params["wa"], params["ba"]          # [H, A], [1, A]
    wl, bl = params["wl"], params["bl"]          # [H, A], [1, A]
    S, H = w1.shape
    A = wa.shape[1]

    sd = _round_up(S, 16)        # sublane-aligned row split (bf16 packs 16 rows/vreg)
    hd = _round_up(H, 128)       # lane-dense hidden width
    od = _round_up(2 * A, 128)   # lane-dense fused-head width
    W = max(hd, od)

    w_slab = jnp.zeros((sd + hd, W), jnp.float32)
    w_slab = w_slab.at[:S, :H].set(w1)
    w_slab = w_slab.at[sd:sd + H, :A].set(wa)
    w_slab = w_slab.at[sd:sd + H, A:2 * A].set(wl)

    b_slab = jnp.zeros((8, W), jnp.float32)
    b_slab = b_slab.at[0, :H].set(b1[0])
    b_slab = b_slab.at[1, :A].set(ba[0])
    b_slab = b_slab.at[1, A:2 * A].set(bl[0])

    meta = dict(S=S, H=H, A=A, sd=sd, hd=hd, od=od, W=W)
    return w_slab.astype(jnp.bfloat16), b_slab, meta


def actor_forward(x, w_slab, b_slab, meta):
    """x: [B, state_dim] f32. Returns (mu, logvar), each [B, action_dim] f32."""
    B, S = x.shape
    sd, hd, od, W, A = meta["sd"], meta["hd"], meta["od"], meta["W"], meta["A"]

    # Pad batch to a sublane-friendly multiple and tile it for DMA pipelining /
    # megacore sharding.  TM <= 512 keeps (x + out) tiles x 2 buffers + weights
    # well under v7x's 32 MiB scoped-VMEM default.
    B_pad = _round_up(B, 16)
    TM = min(512, B_pad)
    Bp = _round_up(B_pad, TM)

    x_p = jnp.zeros((Bp, sd), jnp.bfloat16)
    x_p = x_p.at[:B, :S].set(x.astype(jnp.bfloat16))

    kernel = functools.partial(actor_kernel, sd=sd, hd=hd, od=od)
    out = pl.pallas_call(
        kernel,
        out_shape=jax.ShapeDtypeStruct((Bp, od), jnp.float32),
        grid_spec=pltpu.PrefetchScalarGridSpec(
            num_scalar_prefetch=0,
            grid=(Bp // TM,),
            in_specs=[
                pl.BlockSpec((TM, sd), lambda i: (i, 0)),       # batch-tiled states
                pl.BlockSpec((sd + hd, W), lambda i: (0, 0)),   # resident weight slab
                pl.BlockSpec((8, W), lambda i: (0, 0)),         # resident bias slab
            ],
            out_specs=pl.BlockSpec((TM, od), lambda i: (i, 0)),  # lane-dense fused out
        ),
        compiler_params=pltpu.CompilerParams(
            dimension_semantics=("parallel",)),  # batch tiles shard across v7x's 2 TCs
    )(x_p, w_slab, b_slab)

    mu = out[:B, :A]
    logvar = out[:B, A:2 * A]
    return mu, logvar


def init_actor_params(key, state_dim, hidden_dim, action_dim):
    """Deterministic init mimicking nn.Linear (U[-1/sqrt(fan_in), 1/sqrt(fan_in)]),
    with the PyTorch module's post-init: action_head.weight *= 0.1, bias *= 0.0."""
    k1, k2, k3, k4, k5, k6 = jax.random.split(key, 6)

    def linear_init(kw, kb, fan_in, fan_out):
        bound = 1.0 / jnp.sqrt(fan_in)
        # stored as [in, out] (transposed from PyTorch's [out, in])
        w = jax.random.uniform(kw, (fan_in, fan_out), jnp.float32, -bound, bound)
        b = jax.random.uniform(kb, (1, fan_out), jnp.float32, -bound, bound)
        return w, b

    w1, b1 = linear_init(k1, k2, state_dim, hidden_dim)
    wa, ba = linear_init(k3, k4, hidden_dim, action_dim)
    wl, bl = linear_init(k5, k6, hidden_dim, action_dim)
    wa = wa * 0.1   # action_head.weight.data.mul_(0.1)
    ba = ba * 0.0   # action_head.bias.data.mul_(0.0)
    return {"w1": w1, "b1": b1, "wa": wa, "ba": ba, "wl": wl, "bl": bl}


def actor_reference_f32(x, p):
    h = jnp.tanh(x @ p["w1"] + p["b1"])
    return h @ p["wa"] + p["ba"], h @ p["wl"] + p["bl"]


def actor_reference_bf16(x, p):
    """Pure-JAX reference with the same bf16 MXU-operand casts the kernel uses."""
    bf = jnp.bfloat16
    h = jnp.tanh(jnp.dot(x.astype(bf), p["w1"].astype(bf),
                         preferred_element_type=jnp.float32) + p["b1"])
    hb = h.astype(bf)
    mu = jnp.dot(hb, p["wa"].astype(bf), preferred_element_type=jnp.float32) + p["ba"]
    lv = jnp.dot(hb, p["wl"].astype(bf), preferred_element_type=jnp.float32) + p["bl"]
    return mu, lv


if __name__ == "__main__":
    key = jax.random.PRNGKey(0)
    batch, state_dim, hidden_dim, action_dim = 2, 16, 32, 4

    kx, kp = jax.random.split(key)
    x = jax.random.normal(kx, (batch, state_dim), jnp.float32)
    params = init_actor_params(kp, state_dim, hidden_dim, action_dim)
    w_slab, b_slab, meta = pack_actor_params(params)

    mu, logvar = actor_forward(x, w_slab, b_slab, meta)
    jax.block_until_ready((mu, logvar))

    # Exact-math check against a reference using the same bf16 operand casts.
    mu_bf, lv_bf = actor_reference_bf16(x, params)
    assert jnp.allclose(mu, mu_bf, atol=1e-3, rtol=1e-3)
    assert jnp.allclose(logvar, lv_bf, atol=1e-3, rtol=1e-3)

    # Loose check against the full-f32 module semantics (bf16 quantization error only).
    mu_f32, lv_f32 = actor_reference_f32(x, params)
    assert jnp.allclose(mu, mu_f32, atol=5e-2, rtol=5e-2)
    assert jnp.allclose(logvar, lv_f32, atol=5e-2, rtol=5e-2)

    print("KERNEL_OK")
</pallas_src>

<mosaic_0001>
module attributes {stable_mosaic.version = 11 : i64} {
  func.func @actor_kernel(%arg0: i32, %arg1: memref<16x16xbf16, #tpu.memory_space<vmem>>, %arg2: memref<144x128xbf16, #tpu.memory_space<vmem>>, %arg3: memref<8x128xf32, #tpu.memory_space<vmem>>, %arg4: memref<16x128xf32, #tpu.memory_space<vmem>>) attributes {dimension_semantics = [#tpu.dimension_semantics<parallel>], iteration_bounds = array<i64: 1>, scalar_prefetch = 0 : i64, scratch_operands = 0 : i64, tpu.core_type = #tpu.core_type<tc>, window_params = [{transform_indices = @transform_0, window_bounds = array<i64: 16, 16>}, {pipeline_mode = #tpu.pipeline_mode<synchronous>, transform_indices = @transform_1, window_bounds = array<i64: 144, 128>}, {pipeline_mode = #tpu.pipeline_mode<synchronous>, transform_indices = @transform_2, window_bounds = array<i64: 8, 128>}, {transform_indices = @transform_3, window_bounds = array<i64: 16, 128>}]} {
    %c0 = arith.constant 0 : index
    %c0_0 = arith.constant 0 : index
    %0 = vector.load %arg1[%c0, %c0_0] : memref<16x16xbf16, #tpu.memory_space<vmem>>, vector<16x16xbf16>
    %c0_1 = arith.constant 0 : index
    %c0_2 = arith.constant 0 : index
    %1 = vector.load %arg2[%c0_1, %c0_2] : memref<144x128xbf16, #tpu.memory_space<vmem>>, vector<16x128xbf16>
    %c16 = arith.constant 16 : index
    %c0_3 = arith.constant 0 : index
    %2 = vector.load %arg2[%c16, %c0_3] : memref<144x128xbf16, #tpu.memory_space<vmem>>, vector<128x128xbf16>
    %c0_4 = arith.constant 0 : index
    %c0_5 = arith.constant 0 : index
    %3 = vector.load %arg3[%c0_4, %c0_5] : memref<8x128xf32, #tpu.memory_space<vmem>>, vector<1x128xf32>
    %c1 = arith.constant 1 : index
    %c0_6 = arith.constant 0 : index
    %4 = vector.load %arg3[%c1, %c0_6] : memref<8x128xf32, #tpu.memory_space<vmem>>, vector<1x128xf32>
    %cst = arith.constant dense<0.000000e+00> : vector<16x128xf32>
    %5 = tpu.matmul %0, %1, %cst {dimension_numbers = #tpu.dot_dimension_numbers<[1], [0], [0], [1], [0, 0, 1, 1], [], []>} : vector<16x16xbf16>, vector<16x128xbf16>, vector<16x128xf32> -> vector<16x128xf32>
    %6 = vector.broadcast %3 : vector<1x128xf32> to vector<16x128xf32>
    %7 = arith.addf %5, %6 : vector<16x128xf32>
    %8 = math.tanh %7 : vector<16x128xf32>
    %9 = arith.truncf %8 : vector<16x128xf32> to vector<16x128xbf16>
    %cst_7 = arith.constant dense<0.000000e+00> : vector<16x128xf32>
    %10 = tpu.matmul %9, %2, %cst_7 {dimension_numbers = #tpu.dot_dimension_numbers<[1], [0], [0], [1], [0, 0, 1, 1], [], []>} : vector<16x128xbf16>, vector<128x128xbf16>, vector<16x128xf32> -> vector<16x128xf32>
    %11 = vector.broadcast %4 : vector<1x128xf32> to vector<16x128xf32>
    %12 = arith.addf %10, %11 : vector<16x128xf32>
    %c0_8 = arith.constant 0 : index
    %c0_9 = arith.constant 0 : index
    %13 = vector.load %arg4[%c0_8, %c0_9] : memref<16x128xf32, #tpu.memory_space<vmem>>, vector<16x128xf32>
    tpu.vector_store %arg4[%c0_8, %c0_9], %12 {strides = array<i32>} : memref<16x128xf32, #tpu.memory_space<vmem>>, vector<16x128xf32>,
    return
  }
  func.func @transform_0(%arg0: i32) -> (i32, i32) {
    %c0_i32 = arith.constant 0 : i32
    %c0_i32_0 = arith.constant 0 : i32
    return %arg0, %c0_i32 : i32, i32
  }
  func.func @transform_1(%arg0: i32) -> (i32, i32) {
    %c0_i32 = arith.constant 0 : i32
    %c0_i32_0 = arith.constant 0 : i32
    %c0_i32_1 = arith.constant 0 : i32
    return %c0_i32, %c0_i32_0 : i32, i32
  }
  func.func @transform_2(%arg0: i32) -> (i32, i32) {
    %c0_i32 = arith.constant 0 : i32
    %c0_i32_0 = arith.constant 0 : i32
    %c0_i32_1 = arith.constant 0 : i32
    return %c0_i32, %c0_i32_0 : i32, i32
  }
  func.func @transform_3(%arg0: i32) -> (i32, i32) {
    %c0_i32 = arith.constant 0 : i32
    %c0_i32_0 = arith.constant 0 : i32
    return %arg0, %c0_i32 : i32, i32
  }
}

</mosaic_0001>

<llo_original>
// kernel: tpu_custom_call.1
$region0: #{tpu_custom_call.1}
  #allocation0 [shape = 'u32[]', space=smem, size = 0x4, offset = 0x4, fixed_abs, tag = 'smem constant byte address 0x4 - core index']
  #allocation1 [shape = 'u32[144,128]{1,0:T(1,128)}', space=vmem, size = 0x12000, scoped, tag = 'internal scratch']
  %s0 = inlined_call_operand.hbm [shape: bf16[16,16], index: 0, kind: input, shape index: {}]
  %s1 = inlined_call_operand.hbm [shape: bf16[144,128], index: 1, kind: input, shape index: {}]
  %s2 = inlined_call_operand.hbm [shape: f32[8,128], index: 2, kind: input, shape index: {}]
  %s3 = inlined_call_operand.hbm [shape: f32[16,128], index: 3, kind: output, shape index: {}]
  %s4 = sld [smem:[#allocation0]]
  $region34: #{tpu_custom_call.1} parent=0
    _
  %s6 = ssub.s32 1, %s4
  %s7 = scalar_select 0, %s6, %s4
  $region1: #{tpu_custom_call.1} parent=0
    #allocation2 [shape = 'u8[4096]{0}', space=vmem, size = 0x1000, scoped, tag = 'input window, operand 0, single buffered']
    #allocation3 [shape = 's32[1]{0}', space=sflag, size = 0x4, scoped, tag = 'scoped memory for tpu_custom_call.1']
    #allocation4 [shape = 's32[1]{0}', space=sflag, size = 0x4, scoped, tag = 'scoped memory for tpu_custom_call.1']
    #allocation5 [shape = 'u8[36864]{0}', space=vmem, size = 0x9000, scoped, tag = 'input window, operand 1, single buffered']
    #allocation6 [shape = 's32[1]{0}', space=sflag, size = 0x4, scoped, tag = 'scoped memory for tpu_custom_call.1']
    #allocation7 [shape = 'u8[4096]{0}', space=vmem, size = 0x1000, scoped, tag = 'input window, operand 2, single buffered']
    #allocation8 [shape = 'u8[8192]{0}', space=vmem, size = 0x2000, scoped, tag = 'output window, operand 0, single buffered']
    %8 = vsyncpa [#allocation3], 0
    %9 = vsyncpa [#allocation6], 0
    %10 = vsyncpa [#allocation4], 0
    // Predicated region
    $region2: #{tpu_custom_call.1} parent=1 // pred_check
      _
    $region3: #{tpu_custom_call.1} parent=1 // pred_check_branch
      %12 = sbr.rel (0) target = $region5
    $region4: #{tpu_custom_call.1} parent=1 // pred_region
      %s14 = ssub.s32 128, 128
      %15 = vsyncadd [#allocation3], %s14
      %s16 = sshll.u32 [#allocation2], 4
      %s17 = int_to_ptr.vmem [resolvable:$true] %s16
      %22 = dma.hbm_to_vmem [thread:$0]  %s0, 128, %s17, [#allocation3], 64, 64, 4
    $region5: #{tpu_custom_call.1} parent=1 // pred_fallthru
      _
    // Predicated region
    $region6: #{tpu_custom_call.1} parent=1 // pred_check
      _
    $region7: #{tpu_custom_call.1} parent=1 // pred_check_branch
      %24 = sbr.rel (0) target = $region9
    $region8: #{tpu_custom_call.1} parent=1 // pred_region
      %s26 = ssub.s32 1152, 1152
      %27 = vsyncadd [#allocation6], %s26
      %s28 = sshll.u32 [#allocation5], 4
      %s29 = int_to_ptr.vmem [resolvable:$true] %s28
      %34 = dma.hbm_to_vmem [thread:$0]  %s1, 1152, %s29, [#allocation6], 64, 64, 4
    $region9: #{tpu_custom_call.1} parent=1 // pred_fallthru
      _
    // Predicated region
    $region10: #{tpu_custom_call.1} parent=1 // pred_check
      _
    $region11: #{tpu_custom_call.1} parent=1 // pred_check_branch
      %36 = sbr.rel (0) target = $region13
    $region12: #{tpu_custom_call.1} parent=1 // pred_region
      %s38 = ssub.s32 128, 128
      %39 = vsyncadd [#allocation6], %s38
      %s41 = sshll.u32 [#allocation7], 4
      %s42 = int_to_ptr.vmem [resolvable:$true] %s41
      %44 = dma.hbm_to_vmem [thread:$0]  %s2, 128, %s42, [#allocation6]
    $region13: #{tpu_custom_call.1} parent=1 // pred_fallthru
      _
    // Predicated region
    $region14: #{tpu_custom_call.1} parent=1 // pred_check
      _
    $region15: #{tpu_custom_call.1} parent=1 // pred_check_branch
      %46 = sbr.rel (0) target = $region17
    $region16: #{tpu_custom_call.1} parent=1 // pred_region
      %47 = dma.done [#allocation3], 128
    $region17: #{tpu_custom_call.1} parent=1 // pred_fallthru
      _
    // Predicated region
    $region18: #{tpu_custom_call.1} parent=1 // pred_check
      _
    $region19: #{tpu_custom_call.1} parent=1 // pred_check_branch
      %49 = sbr.rel (0) target = $region21
    $region20: #{tpu_custom_call.1} parent=1 // pred_region
      %50 = dma.done [#allocation6], 1152
    $region21: #{tpu_custom_call.1} parent=1 // pred_fallthru
      _
    // Predicated region
    $region22: #{tpu_custom_call.1} parent=1 // pred_check
      _
    $region23: #{tpu_custom_call.1} parent=1 // pred_check_branch
      %52 = sbr.rel (0) target = $region25
    $region24: #{tpu_custom_call.1} parent=1 // pred_region
      %53 = dma.done [#allocation6], 128
    $region25: #{tpu_custom_call.1} parent=1 // pred_fallthru
      _
    %v55 = vld [vmem:[#allocation2] sm:$0xf]
    %v56 = vld [vmem:[#allocation2 + $0x4] sm:$0xf]
    %v57 = vld [vmem:[#allocation5] sm:$0xf]
    %v58 = vld [vmem:[#allocation5 + $0x4] sm:$0xf]
    %v59 = vld [vmem:[#allocation5 + $0x8] sm:$0xf]
    %v60 = vld [vmem:[#allocation5 + $0xc] sm:$0xf]
    %v61 = vld [vmem:[#allocation5 + $0x10] sm:$0xf]
    %v62 = vld [vmem:[#allocation5 + $0x14] sm:$0xf]
    %v63 = vld [vmem:[#allocation5 + $0x18] sm:$0xf]
    %v64 = vld [vmem:[#allocation5 + $0x1c] sm:$0xf]
    %v65 = vld [vmem:[#allocation5 + $0x20] sm:$0xf]
    %v66 = vld [vmem:[#allocation5 + $0x24] sm:$0xf]
    %v67 = vld [vmem:[#allocation5 + $0x28] sm:$0xf]
    %v68 = vld [vmem:[#allocation5 + $0x2c] sm:$0xf]
    %v69 = vld [vmem:[#allocation5 + $0x30] sm:$0xf]
    %v70 = vld [vmem:[#allocation5 + $0x34] sm:$0xf]
    %v71 = vld [vmem:[#allocation5 + $0x38] sm:$0xf]
    %v72 = vld [vmem:[#allocation5 + $0x3c] sm:$0xf]
    %v73 = vld [vmem:[#allocation5 + $0x40] sm:$0xf]
    %v74 = vld [vmem:[#allocation5 + $0x44] sm:$0xf]
    %v75 = vld [vmem:[#allocation7] sm:$0x1]
    %v76 = vld [vmem:[#allocation7 + $0x1] sm:$0x1]
    %v77 = vlaneseq
    %v78 = vshrl.u32 %v77, 7
    %v79 = vsub.s32 0, %v78
    %v80 = vrot.slane %v75, %v79
    %v83 = vunpack.c.l.b16 %v55
    %v84 = vunpack.c.l.b16 %v56
    %v85 = vpack.c.b16 %v84, %v83
    %v88 = vunpack.c.l.b16 %v57
    %v89 = vunpack.c.l.b16 %v58
    %v90 = vpack.c.b16 %v89, %v88
    %vm92 = vcmask 130048
    %v94 = vsel %vm92, %v85, 0
    %96 = vmatprep.subr.bf16.mxu0 0
    %97 = vmatpush1.bf16.msra.mxu0 %v90
    %98 = vmatprep.subr.bf16.mxu0 0
    %99 = vmatpush1.bf16.msra.mxu0 0
    %100 = vmatprep.subr.bf16.mxu0 0
    %101 = vmatpush1.bf16.msra.mxu0 0
    %102 = vmatprep.subr.bf16.mxu0 0
    %103 = vmatpush1.bf16.msra.mxu0 0
    %104 = vmatprep.subr.bf16.mxu0 0
    %105 = vmatpush1.bf16.msra.mxu0 0
    %106 = vmatprep.subr.bf16.mxu0 0
    %107 = vmatpush1.bf16.msra.mxu0 0
    %108 = vmatprep.subr.bf16.mxu0 0
    %109 = vmatpush1.bf16.msra.mxu0 0
    %110 = vmatprep.subr.bf16.mxu0 0
    %111 = vmatpush1.bf16.msra.mxu0 0
    %112 = vmatprep.subr.bf16.mxu0 0
    %113 = vmatpush1.bf16.msra.mxu0 0
    %114 = vmatprep.subr.bf16.mxu0 0
    %115 = vmatpush1.bf16.msra.mxu0 0
    %116 = vmatprep.subr.bf16.mxu0 0
    %117 = vmatpush1.bf16.msra.mxu0 0
    %118 = vmatprep.subr.bf16.mxu0 0
    %119 = vmatpush1.bf16.msra.mxu0 0
    %120 = vmatprep.subr.bf16.mxu0 0
    %121 = vmatpush1.bf16.msra.mxu0 0
    %122 = vmatprep.subr.bf16.mxu0 0
    %123 = vmatpush1.bf16.msra.mxu0 0
    %124 = vmatprep.subr.bf16.mxu0 0
    %125 = vmatpush1.bf16.msra.mxu0 0
    %126 = vmatprep.subr.bf16.mxu0 0
    %127 = vmatpush1.bf16.msra.mxu0 0
    %128 = vmatprep.mubr.bf16.mxu0 0
    %129 = vmatmul.mubr.bf16.gmra.mrb[0].mxu0 %v94
    %v130 = vpop.f32.mrb[0].mxu0
    %v131 = vadd.f32 %v80, %v130
    %v132 = vpop.f32.mrb[0].mxu0
    %v133 = vpop.f32.mrb[0].mxu0
    %v134 = vadd.f32 %v80, %v133
    %v135 = vpop.f32.mrb[0].mxu0
    %136 = vdwg.mxu0
    %v137 = vtanh.pop %v131
    %v138 = vtanh.pop %v134
    %v139 = vpack.c.bf16 %v138, %v137
    %v140 = vlaneseq
    %v141 = vshrl.u32 %v140, 7
    %v142 = vsub.s32 0, %v141
    %v143 = vrot.slane %v76, %v142
    %v160 = vunpack.c.l.b16 %v59
    %v161 = vunpack.c.l.b16 %v60
    %v162 = vunpack.c.l.b16 %v61
    %v163 = vunpack.c.l.b16 %v62
    %v164 = vunpack.c.l.b16 %v63
    %v165 = vunpack.c.l.b16 %v64
    %v166 = vunpack.c.l.b16 %v65
    %v167 = vunpack.c.l.b16 %v66
    %v168 = vunpack.c.l.b16 %v67
    %v169 = vunpack.c.l.b16 %v68
    %v170 = vunpack.c.l.b16 %v69
    %v171 = vunpack.c.l.b16 %v70
    %v172 = vunpack.c.l.b16 %v71
    %v173 = vunpack.c.l.b16 %v72
    %v174 = vunpack.c.l.b16 %v73
    %v175 = vunpack.c.l.b16 %v74
    %v176 = vpack.c.b16 %v161, %v160
    %v177 = vpack.c.b16 %v163, %v162
    %v178 = vpack.c.b16 %v165, %v164
    %v179 = vpack.c.b16 %v167, %v166
    %v180 = vpack.c.b16 %v169, %v168
    %v181 = vpack.c.b16 %v171, %v170
    %v182 = vpack.c.b16 %v173, %v172
    %v183 = vpack.c.b16 %v175, %v174
    %192 = vmatprep.subr.bf16.mxu0 0
    %193 = vmatpush1.bf16.msra.mxu0 %v176
    %194 = vmatprep.subr.bf16.mxu0 0
    %195 = vmatpush1.bf16.msra.mxu0 %v177
    %196 = vmatprep.subr.bf16.mxu0 0
    %197 = vmatpush1.bf16.msra.mxu0 %v178
    %198 = vmatprep.subr.bf16.mxu0 0
    %199 = vmatpush1.bf16.msra.mxu0 %v179
    %200 = vmatprep.subr.bf16.mxu0 0
    %201 = vmatpush1.bf16.msra.mxu0 %v180
    %202 = vmatprep.subr.bf16.mxu0 0
    %203 = vmatpush1.bf16.msra.mxu0 %v181
    %204 = vmatprep.subr.bf16.mxu0 0
    %205 = vmatpush1.bf16.msra.mxu0 %v182
    %206 = vmatprep.subr.bf16.mxu0 0
    %207 = vmatpush1.bf16.msra.mxu0 %v183
    %208 = vmatprep.subr.bf16.mxu0 0
    %209 = vmatpush1.bf16.msra.mxu0 0
    %210 = vmatprep.subr.bf16.mxu0 0
    %211 = vmatpush1.bf16.msra.mxu0 0
    %212 = vmatprep.subr.bf16.mxu0 0
    %213 = vmatpush1.bf16.msra.mxu0 0
    %214 = vmatprep.subr.bf16.mxu0 0
    %215 = vmatpush1.bf16.msra.mxu0 0
    %216 = vmatprep.subr.bf16.mxu0 0
    %217 = vmatpush1.bf16.msra.mxu0 0
    %218 = vmatprep.subr.bf16.mxu0 0
    %219 = vmatpush1.bf16.msra.mxu0 0
    %220 = vmatprep.subr.bf16.mxu0 0
    %221 = vmatpush1.bf16.msra.mxu0 0
    %222 = vmatprep.subr.bf16.mxu0 0
    %223 = vmatpush1.bf16.msra.mxu0 0
    %224 = vmatprep.mubr.bf16.mxu0 0
    %225 = vmatmul.mubr.bf16.gmra.mrb[0].mxu0 %v139
    %v226 = vpop.f32.mrb[0].mxu0
    %v227 = vadd.f32 %v143, %v226
    %v228 = vpop.f32.mrb[0].mxu0
    %v229 = vpop.f32.mrb[0].mxu0
    %v230 = vadd.f32 %v143, %v229
    %v231 = vpop.f32.mrb[0].mxu0
    %232 = vdwg.mxu0
    %233 = vst [vmem:[#allocation8] sm:$0xff] %v227
    %234 = vst [vmem:[#allocation8 + $0x8] sm:$0xff] %v230
    // Predicated region
    $region26: #{tpu_custom_call.1} parent=1 // pred_check
      _
    $region27: #{tpu_custom_call.1} parent=1 // pred_check_branch
      %236 = sbr.rel (0) target = $region29
    $region28: #{tpu_custom_call.1} parent=1 // pred_region
      %s238 = ssub.s32 256, 256
      %239 = vsyncadd [#allocation4], %s238
      %s240 = sshll.u32 [#allocation8], 4
      %s241 = int_to_ptr.vmem [resolvable:$true] %s240
      %246 = dma.vmem_to_hbm [thread:$0]  %s241, 256, %s3, [#allocation4], 128, 128, 8
    $region29: #{tpu_custom_call.1} parent=1 // pred_fallthru
      _
    // Predicated region
    $region30: #{tpu_custom_call.1} parent=1 // pred_check
      _
    $region31: #{tpu_custom_call.1} parent=1 // pred_check_branch
      %248 = sbr.rel (0) target = $region33
    $region32: #{tpu_custom_call.1} parent=1 // pred_region
      %249 = dma.done [#allocation4], 256
    $region33: #{tpu_custom_call.1} parent=1 // pred_fallthru
      _
    %250 = vsyncpa [#allocation3], 1
    %251 = vsyncpa [#allocation6], 1
    %252 = vsyncpa [#allocation4], 1

</llo_original>
